<compile_context>
chip_gen: v7x
topology: tpu7x:2x2x1
jax: 0.10.0
libtpu: 0.0.40
codegen_flags: <defaults>
</compile_context>

<pallas_src>
import functools

import jax
import jax.numpy as jnp
from jax.experimental import pallas as pl
from jax.experimental.pallas import tpu as pltpu


# ----------------------------- kernels ---------------------------------------

def _pw_kernel_per_batch(x_ref, w_ref, b_ref, o_ref):
    # x_ref: (Cin, tn)  w_ref: (Cout, Cin)  b_ref: (Cout, 1) f32  o_ref: (Cout, tn)
    acc = jnp.dot(w_ref[...], x_ref[...], preferred_element_type=jnp.float32)
    o_ref[...] = (acc + b_ref[...]).astype(o_ref.dtype)


def _pw_kernel_batched(x_ref, w_ref, b_ref, o_ref, *, batch):
    # x_ref: (B, Cin, tn)  o_ref: (B, Cout, tn); `batch` is a small static int.
    w = w_ref[...]
    bias = b_ref[...]
    for i in range(batch):                       # static unroll over the batch
        acc = jnp.dot(w, x_ref[i], preferred_element_type=jnp.float32)
        o_ref[i] = (acc + bias).astype(o_ref.dtype)


# --------------------------- sizing helpers -----------------------------------

def _vmem_limits():
    """(compiler vmem_limit_bytes, tile-sizing budget bytes) for this TPU gen."""
    try:
        cap = int(pltpu.get_tpu_info().vmem_capacity_bytes)
    except Exception:
        cap = 64 << 20            # most restrictive generation (v7x per-core VMEM)
    vmem_limit = int(cap * 0.75)           # ~96 MiB on v5e/v6e, ~48 MiB on v7x
    tile_budget = int(vmem_limit * 0.85)   # headroom for compiler scratch
    return vmem_limit, tile_budget


def _choose_time_tile(t_out, rows_per_step, itemsize, resident_bytes, budget):
    """Largest lane-dense time tile such that the double-buffered input/output
    tiles plus the resident weight/bias fit in `budget` bytes of VMEM."""
    per_col = 2 * rows_per_step * itemsize       # 2x = double-buffered in + out
    avail = budget - resident_bytes
    if avail >= t_out * per_col:
        return int(t_out)                        # whole time axis in one block
    tn = (max(avail, per_col * 128) // per_col // 128) * 128
    return int(max(128, min(tn, t_out)))


def get_sequence_lengths(seq_lengths, kernel_size=1, stride=1, padding=0,
                         dilation=1):
    """Equivalent of BaseConv2d._get_sequence_lengths (pure scalar glue)."""
    return (seq_lengths + 2 * padding
            - dilation * (kernel_size - 1) - 1) // stride + 1


# ------------------------------ wrapper ---------------------------------------

def pointwise_conv1d(x, weight, bias=None, stride=1, padding=0,
                     tile_budget_bytes=None):
    """Equivalent of nn.Conv1d(kernel_size=1)(x) in PyTorch NCT layout.

    Args:
      x:      (B, C_in, T)
      weight: (C_out, C_in, 1)
      bias:   (C_out,) or None
      tile_budget_bytes: optional VMEM budget override (testing / tuning).
    Returns:
      (B, C_out, T_out), T_out = (T + 2*padding - 1) // stride + 1
    """
    B, Cin, T = x.shape
    Cout = weight.shape[0]

    # kernel_size == 1 glue: padding adds zero columns, stride subsamples time.
    # TODO(synk): fold stride/padding into the BlockSpec index math (strided
    # pl.ds window + pl.when zero-fill on edge tiles) to keep a single HBM
    # pass on the stride>1 / padding>0 path.
    if padding > 0:
        x = jnp.pad(x, ((0, 0), (0, 0), (padding, padding)))
    if stride > 1:
        x = x[:, :, ::stride]
    T_out = x.shape[2]

    w2d = weight.reshape(Cout, Cin).astype(x.dtype)   # keep HBM/MXU dtype == x
    if bias is None:
        b2d = jnp.zeros((Cout, 1), jnp.float32)
    else:
        b2d = bias.reshape(Cout, 1).astype(jnp.float32)   # f32 bias add

    itemsize = jnp.dtype(x.dtype).itemsize
    vmem_limit, tile_budget = _vmem_limits()
    if tile_budget_bytes is not None:
        tile_budget = int(tile_budget_bytes)

    # Resident weight + bias, counted double-buffered (constant index map, but
    # Pallas still allocates two buffers by default).
    resident = 2 * (Cout * Cin * itemsize + Cout * 4)

    # Prefer folding the batch into the block (fewer, larger grid steps) as
    # long as that still allows a decently wide (>=512 or full-T) time tile.
    tn_folded = _choose_time_tile(T_out, B * (Cin + Cout), itemsize,
                                  resident, tile_budget)
    fold_batch = tn_folded >= min(T_out, 512)

    cost = pl.CostEstimate(
        flops=2 * B * T_out * Cin * Cout,
        transcendentals=0,
        bytes_accessed=(B * Cin * T_out * itemsize
                        + Cout * Cin * itemsize + Cout * 4
                        + B * Cout * T_out * itemsize),
    )

    if fold_batch:
        tn = tn_folded
        grid = (pl.cdiv(T_out, tn),)
        kernel = functools.partial(_pw_kernel_batched, batch=B)
        in_specs = [
            pl.BlockSpec((B, Cin, tn), lambda j: (0, 0, j)),
            # Weight / bias: constant block index -> stay resident in VMEM.
            pl.BlockSpec((Cout, Cin), lambda j: (0, 0)),
            pl.BlockSpec((Cout, 1), lambda j: (0, 0)),
        ]
        out_specs = pl.BlockSpec((B, Cout, tn), lambda j: (0, 0, j))
        semantics = ("parallel",)
    else:
        tn = _choose_time_tile(T_out, Cin + Cout, itemsize, resident,
                               tile_budget)
        # Time leading so the megacore (v7x) split lands on the long axis.
        grid = (pl.cdiv(T_out, tn), B)
        kernel = _pw_kernel_per_batch
        in_specs = [
            pl.BlockSpec((None, Cin, tn), lambda j, b: (b, 0, j)),
            pl.BlockSpec((Cout, Cin), lambda j, b: (0, 0)),
            pl.BlockSpec((Cout, 1), lambda j, b: (0, 0)),
        ]
        out_specs = pl.BlockSpec((None, Cout, tn), lambda j, b: (b, 0, j))
        semantics = ("parallel", "parallel")

    return pl.pallas_call(
        kernel,
        out_shape=jax.ShapeDtypeStruct((B, Cout, T_out), x.dtype),
        grid=grid,
        in_specs=in_specs,
        out_specs=out_specs,
        compiler_params=pltpu.CompilerParams(
            dimension_semantics=semantics,
            vmem_limit_bytes=vmem_limit),
        cost_estimate=cost,
    )(x, w2d, b2d)


# ----------------------------- reference --------------------------------------

def _reference(x, weight, bias, stride=1, padding=0):
    if padding > 0:
        x = jnp.pad(x, ((0, 0), (0, 0), (padding, padding)))
    if stride > 1:
        x = x[:, :, ::stride]
    out = jnp.einsum("oc,bct->bot", weight[:, :, 0].astype(jnp.float32),
                     x.astype(jnp.float32))
    if bias is not None:
        out = out + bias[None, :, None].astype(jnp.float32)
    return out


if __name__ == "__main__":
    key = jax.random.PRNGKey(0)
    kx, kw, kb, kx2 = jax.random.split(key, 4)

    # Small shapes consistent with the module's forward: (batch, channels, time)
    B, Cin, Cout, T = 2, 4, 8, 16
    x = jax.random.normal(kx, (B, Cin, T), dtype=jnp.float32)

    # Deterministic Conv1d-style init: U(-k, k), k = 1/sqrt(Cin * kernel_size)
    k = 1.0 / (Cin ** 0.5)
    weight = jax.random.uniform(kw, (Cout, Cin, 1), minval=-k, maxval=k,
                                dtype=jnp.float32)
    bias = jax.random.uniform(kb, (Cout,), minval=-k, maxval=k,
                              dtype=jnp.float32)

    # 1) basic pointwise conv (batch folded into the block, single grid step)
    out = jax.block_until_ready(pointwise_conv1d(x, weight, bias))
    ref = _reference(x, weight, bias)
    assert out.shape == (B, Cout, T)
    assert jnp.allclose(out, ref, atol=1e-5, rtol=1e-5)

    # 2) stride / padding path (kernel_size == 1 semantics)
    out_sp = jax.block_until_ready(
        pointwise_conv1d(x, weight, bias, stride=2, padding=1))
    ref_sp = _reference(x, weight, bias, stride=2, padding=1)
    t_sp = int(get_sequence_lengths(T, kernel_size=1, stride=2, padding=1))
    assert out_sp.shape == (B, Cout, t_sp)
    assert jnp.allclose(out_sp, ref_sp, atol=1e-5, rtol=1e-5)

    # 3) longer sequence with a constrained tile budget: exercises the
    #    multi-step batched-block grid (including a partial last time tile).
    T_big = 4096
    x_big = jax.random.normal(kx2, (B, Cin, T_big), dtype=jnp.float32)
    out_big = jax.block_until_ready(
        pointwise_conv1d(x_big, weight, bias, tile_budget_bytes=256 << 10))
    ref_big = _reference(x_big, weight, bias)
    assert out_big.shape == (B, Cout, T_big)
    assert jnp.allclose(out_big, ref_big, atol=1e-5, rtol=1e-5)

    # 4) even tighter budget: exercises the non-folded (time, batch) grid path.
    out_nb = jax.block_until_ready(
        pointwise_conv1d(x_big, weight, bias, tile_budget_bytes=64 << 10))
    assert jnp.allclose(out_nb, ref_big, atol=1e-5, rtol=1e-5)

    # 5) bf16 activations: weight follows the activation dtype, f32 accumulate.
    x_bf = x_big.astype(jnp.bfloat16)
    out_bf = jax.block_until_ready(pointwise_conv1d(x_bf, weight, bias))
    ref_bf = _reference(x_bf, weight.astype(jnp.bfloat16), bias)
    assert out_bf.dtype == jnp.bfloat16
    assert jnp.allclose(out_bf.astype(jnp.float32), ref_bf, atol=5e-2, rtol=5e-2)

    print("KERNEL_OK")
</pallas_src>

<mosaic_0001>
module attributes {stable_mosaic.version = 11 : i64} {
  func.func @_pw_kernel_batched(%arg0: i32, %arg1: memref<2x4x16xf32, #tpu.memory_space<vmem>>, %arg2: memref<8x4xf32, #tpu.memory_space<vmem>>, %arg3: memref<8x1xf32, #tpu.memory_space<vmem>>, %arg4: memref<2x8x16xf32, #tpu.memory_space<vmem>>) attributes {dimension_semantics = [#tpu.dimension_semantics<parallel>], iteration_bounds = array<i64: 1>, scalar_prefetch = 0 : i64, scratch_operands = 0 : i64, tpu.core_type = #tpu.core_type<tc>, window_params = [{transform_indices = @transform_0, window_bounds = array<i64: 2, 4, 16>}, {pipeline_mode = #tpu.pipeline_mode<synchronous>, transform_indices = @transform_1, window_bounds = array<i64: 8, 4>}, {pipeline_mode = #tpu.pipeline_mode<synchronous>, transform_indices = @transform_2, window_bounds = array<i64: 8, 1>}, {transform_indices = @transform_3, window_bounds = array<i64: 2, 8, 16>}]} {
    %c0 = arith.constant 0 : index
    %c0_0 = arith.constant 0 : index
    %0 = vector.load %arg2[%c0, %c0_0] : memref<8x4xf32, #tpu.memory_space<vmem>>, vector<8x4xf32>
    %c0_1 = arith.constant 0 : index
    %c0_2 = arith.constant 0 : index
    %1 = vector.load %arg3[%c0_1, %c0_2] : memref<8x1xf32, #tpu.memory_space<vmem>>, vector<8x1xf32>
    %c0_3 = arith.constant 0 : index
    %c0_4 = arith.constant 0 : index
    %c0_5 = arith.constant 0 : index
    %2 = vector.load %arg1[%c0_3, %c0_4, %c0_5] : memref<2x4x16xf32, #tpu.memory_space<vmem>>, vector<1x4x16xf32>
    %3 = vector.shape_cast %2 : vector<1x4x16xf32> to vector<4x16xf32>
    %cst = arith.constant dense<0.000000e+00> : vector<8x16xf32>
    %4 = tpu.matmul %0, %3, %cst {dimension_numbers = #tpu.dot_dimension_numbers<[1], [0], [0], [1], [0, 0, 1, 1], [], []>} : vector<8x4xf32>, vector<4x16xf32>, vector<8x16xf32> -> vector<8x16xf32>
    %5 = vector.broadcast %1 : vector<8x1xf32> to vector<8x16xf32>
    %6 = arith.addf %4, %5 : vector<8x16xf32>
    %c0_6 = arith.constant 0 : index
    %c0_7 = arith.constant 0 : index
    %c0_8 = arith.constant 0 : index
    %7 = vector.load %arg4[%c0_6, %c0_7, %c0_8] : memref<2x8x16xf32, #tpu.memory_space<vmem>>, vector<1x8x16xf32>
    %8 = vector.shape_cast %7 : vector<1x8x16xf32> to vector<8x16xf32>
    %9 = vector.shape_cast %6 : vector<8x16xf32> to vector<1x8x16xf32>
    tpu.vector_store %arg4[%c0_6, %c0_7, %c0_8], %9 {strides = array<i32>} : memref<2x8x16xf32, #tpu.memory_space<vmem>>, vector<1x8x16xf32>,
    %c1 = arith.constant 1 : index
    %c0_9 = arith.constant 0 : index
    %c0_10 = arith.constant 0 : index
    %10 = vector.load %arg1[%c1, %c0_9, %c0_10] : memref<2x4x16xf32, #tpu.memory_space<vmem>>, vector<1x4x16xf32>
    %11 = vector.shape_cast %10 : vector<1x4x16xf32> to vector<4x16xf32>
    %cst_11 = arith.constant dense<0.000000e+00> : vector<8x16xf32>
    %12 = tpu.matmul %0, %11, %cst_11 {dimension_numbers = #tpu.dot_dimension_numbers<[1], [0], [0], [1], [0, 0, 1, 1], [], []>} : vector<8x4xf32>, vector<4x16xf32>, vector<8x16xf32> -> vector<8x16xf32>
    %13 = vector.broadcast %1 : vector<8x1xf32> to vector<8x16xf32>
    %14 = arith.addf %12, %13 : vector<8x16xf32>
    %c1_12 = arith.constant 1 : index
    %c0_13 = arith.constant 0 : index
    %c0_14 = arith.constant 0 : index
    %15 = vector.load %arg4[%c1_12, %c0_13, %c0_14] : memref<2x8x16xf32, #tpu.memory_space<vmem>>, vector<1x8x16xf32>
    %16 = vector.shape_cast %15 : vector<1x8x16xf32> to vector<8x16xf32>
    %17 = vector.shape_cast %14 : vector<8x16xf32> to vector<1x8x16xf32>
    tpu.vector_store %arg4[%c1_12, %c0_13, %c0_14], %17 {strides = array<i32>} : memref<2x8x16xf32, #tpu.memory_space<vmem>>, vector<1x8x16xf32>,
    return
  }
  func.func @transform_0(%arg0: i32) -> (i32, i32, i32) {
    %c0_i32 = arith.constant 0 : i32
    %c0_i32_0 = arith.constant 0 : i32
    %c0_i32_1 = arith.constant 0 : i32
    return %c0_i32, %c0_i32_0, %arg0 : i32, i32, i32
  }
  func.func @transform_1(%arg0: i32) -> (i32, i32) {
    %c0_i32 = arith.constant 0 : i32
    %c0_i32_0 = arith.constant 0 : i32
    %c0_i32_1 = arith.constant 0 : i32
    return %c0_i32, %c0_i32_0 : i32, i32
  }
  func.func @transform_2(%arg0: i32) -> (i32, i32) {
    %c0_i32 = arith.constant 0 : i32
    %c0_i32_0 = arith.constant 0 : i32
    %c0_i32_1 = arith.constant 0 : i32
    return %c0_i32, %c0_i32_0 : i32, i32
  }
  func.func @transform_3(%arg0: i32) -> (i32, i32, i32) {
    %c0_i32 = arith.constant 0 : i32
    %c0_i32_0 = arith.constant 0 : i32
    %c0_i32_1 = arith.constant 0 : i32
    return %c0_i32, %c0_i32_0, %arg0 : i32, i32, i32
  }
}

</mosaic_0001>

<llo_original>
// kernel: tpu_custom_call.1
$region0: #{tpu_custom_call.1}
  #allocation0 [shape = 'u32[]', space=smem, size = 0x4, offset = 0x4, fixed_abs, tag = 'smem constant byte address 0x4 - core index']
  #allocation1 [shape = 'u32[144,128]{1,0:T(1,128)}', space=vmem, size = 0x12000, scoped, tag = 'internal scratch']
  %s0 = inlined_call_operand.vmem [shape: f32[2,4,16], index: 0, kind: input, shape index: {}]
  %s1 = inlined_call_operand.vmem [shape: f32[8,4], index: 1, kind: input, shape index: {}]
  %s2 = inlined_call_operand.vmem [shape: f32[8,1], index: 2, kind: input, shape index: {}]
  %s3 = inlined_call_operand.hbm [shape: f32[2,8,16], index: 3, kind: output, shape index: {}]
  %s4 = sld [smem:[#allocation0]]
  $region22: #{tpu_custom_call.1} parent=0
    _
  %s6 = ssub.s32 1, %s4
  %s7 = scalar_select 0, %s6, %s4
  $region1: #{tpu_custom_call.1} parent=0
    #allocation2 [shape = 'u8[8192]{0}', space=vmem, size = 0x2000, scoped, tag = 'output window, operand 0, single buffered']
    #allocation3 [shape = 's32[1]{0}', space=sflag, size = 0x4, scoped, tag = 'scoped memory for tpu_custom_call.1']
    %8 = vsyncpa [#allocation3], 0
    // Predicated region
    $region2: #{tpu_custom_call.1} parent=1 // pred_check
      _
    $region3: #{tpu_custom_call.1} parent=1 // pred_check_branch
      %10 = sbr.rel (0) target = $region5
    $region4: #{tpu_custom_call.1} parent=1 // pred_region
      _
    $region5: #{tpu_custom_call.1} parent=1 // pred_fallthru
      _
    // Predicated region
    $region6: #{tpu_custom_call.1} parent=1 // pred_check
      _
    $region7: #{tpu_custom_call.1} parent=1 // pred_check_branch
      %12 = sbr.rel (0) target = $region9
    $region8: #{tpu_custom_call.1} parent=1 // pred_region
      _
    $region9: #{tpu_custom_call.1} parent=1 // pred_fallthru
      _
    // Predicated region
    $region10: #{tpu_custom_call.1} parent=1 // pred_check
      _
    $region11: #{tpu_custom_call.1} parent=1 // pred_check_branch
      %14 = sbr.rel (0) target = $region13
    $region12: #{tpu_custom_call.1} parent=1 // pred_region
      _
    $region13: #{tpu_custom_call.1} parent=1 // pred_fallthru
      _
    %v15 = vld [vmem:[%s1] sm:$0xff]
    %v16 = vld [vmem:[%s2] sm:$0xff]
    %v17 = vld [vmem:[%s0] sm:$0xf]
    %19 = vset.pattern.permute.xlu0 0
    %20 = vperm.xlu0 %19, %v16
    %v21 = vpop.permute.xlu0 %20
    %vm23 = vcmask 31744
    %v25 = vsel %vm23, %v15, 0
    %vm27 = vcmask 1043456
    %v29 = vsel %vm27, %v17, 0
    %31 = vmatprep.subr.mxu0 0.0
    %32 = vmatpush1.msra.mxu0 %v29
    %33 = vmatprep.subr.mxu0 0.0
    %34 = vmatpush1.msra.mxu0 0.0
    %35 = vmatprep.subr.mxu0 0.0
    %36 = vmatpush1.msra.mxu0 0.0
    %37 = vmatprep.subr.mxu0 0.0
    %38 = vmatpush1.msra.mxu0 0.0
    %39 = vmatprep.subr.mxu0 0.0
    %40 = vmatpush1.msra.mxu0 0.0
    %41 = vmatprep.subr.mxu0 0.0
    %42 = vmatpush1.msra.mxu0 0.0
    %43 = vmatprep.subr.mxu0 0.0
    %44 = vmatpush1.msra.mxu0 0.0
    %45 = vmatprep.subr.mxu0 0.0
    %46 = vmatpush1.msra.mxu0 0.0
    %47 = vmatprep.subr.mxu0 0.0
    %48 = vmatpush1.msra.mxu0 0.0
    %49 = vmatprep.subr.mxu0 0.0
    %50 = vmatpush1.msra.mxu0 0.0
    %51 = vmatprep.subr.mxu0 0.0
    %52 = vmatpush1.msra.mxu0 0.0
    %53 = vmatprep.subr.mxu0 0.0
    %54 = vmatpush1.msra.mxu0 0.0
    %55 = vmatprep.subr.mxu0 0.0
    %56 = vmatpush1.msra.mxu0 0.0
    %57 = vmatprep.subr.mxu0 0.0
    %58 = vmatpush1.msra.mxu0 0.0
    %59 = vmatprep.subr.mxu0 0.0
    %60 = vmatpush1.msra.mxu0 0.0
    %61 = vmatprep.subr.mxu0 0.0
    %62 = vmatpush1.msra.mxu0 0.0
    %63 = vmatprep.subr.mxu0 0.0
    %64 = vmatpush1.msra.mxu0 0.0
    %65 = vmatprep.subr.mxu0 0.0
    %66 = vmatpush1.msra.mxu0 0.0
    %67 = vmatprep.subr.mxu0 0.0
    %68 = vmatpush1.msra.mxu0 0.0
    %69 = vmatprep.subr.mxu0 0.0
    %70 = vmatpush1.msra.mxu0 0.0
    %71 = vmatprep.subr.mxu0 0.0
    %72 = vmatpush1.msra.mxu0 0.0
    %73 = vmatprep.subr.mxu0 0.0
    %74 = vmatpush1.msra.mxu0 0.0
    %75 = vmatprep.subr.mxu0 0.0
    %76 = vmatpush1.msra.mxu0 0.0
    %77 = vmatprep.subr.mxu0 0.0
    %78 = vmatpush1.msra.mxu0 0.0
    %79 = vmatprep.subr.mxu0 0.0
    %80 = vmatpush1.msra.mxu0 0.0
    %81 = vmatprep.subr.mxu0 0.0
    %82 = vmatpush1.msra.mxu0 0.0
    %83 = vmatprep.subr.mxu0 0.0
    %84 = vmatpush1.msra.mxu0 0.0
    %85 = vmatprep.subr.mxu0 0.0
    %86 = vmatpush1.msra.mxu0 0.0
    %87 = vmatprep.subr.mxu0 0.0
    %88 = vmatpush1.msra.mxu0 0.0
    %89 = vmatprep.subr.mxu0 0.0
    %90 = vmatpush1.msra.mxu0 0.0
    %91 = vmatprep.subr.mxu0 0.0
    %92 = vmatpush1.msra.mxu0 0.0
    %93 = vmatprep.subr.mxu0 0.0
    %94 = vmatpush1.msra.mxu0 0.0
    %95 = vmatprep.mubr.f32.mxu0 0.0
    %96 = vmatmul.mubr.f32.gmra.mrb[0].mxu0 %v25
    %v97 = vpop.f32.mrb[0].mxu0
    %v98 = vadd.f32 %v21, %v97
    %v99 = vpop.f32.mrb[0].mxu0
    %100 = vdwg.mxu0
    %vm101 = vcmask 130048
    %102 = vst.msk [vmem:[#allocation2] sm:$0xff] %vm101, %v98
    %s103 = scalar_lea.vmem %s0, 4
    %v104 = vld [vmem:[%s103] sm:$0xf]
    %v106 = vsel %vm27, %v104, 0
    %108 = vmatprep.subr.mxu0 0.0
    %109 = vmatpush1.msra.mxu0 %v106
    %110 = vmatprep.subr.mxu0 0.0
    %111 = vmatpush1.msra.mxu0 0.0
    %112 = vmatprep.subr.mxu0 0.0
    %113 = vmatpush1.msra.mxu0 0.0
    %114 = vmatprep.subr.mxu0 0.0
    %115 = vmatpush1.msra.mxu0 0.0
    %116 = vmatprep.subr.mxu0 0.0
    %117 = vmatpush1.msra.mxu0 0.0
    %118 = vmatprep.subr.mxu0 0.0
    %119 = vmatpush1.msra.mxu0 0.0
    %120 = vmatprep.subr.mxu0 0.0
    %121 = vmatpush1.msra.mxu0 0.0
    %122 = vmatprep.subr.mxu0 0.0
    %123 = vmatpush1.msra.mxu0 0.0
    %124 = vmatprep.subr.mxu0 0.0
    %125 = vmatpush1.msra.mxu0 0.0
    %126 = vmatprep.subr.mxu0 0.0
    %127 = vmatpush1.msra.mxu0 0.0
    %128 = vmatprep.subr.mxu0 0.0
    %129 = vmatpush1.msra.mxu0 0.0
    %130 = vmatprep.subr.mxu0 0.0
    %131 = vmatpush1.msra.mxu0 0.0
    %132 = vmatprep.subr.mxu0 0.0
    %133 = vmatpush1.msra.mxu0 0.0
    %134 = vmatprep.subr.mxu0 0.0
    %135 = vmatpush1.msra.mxu0 0.0
    %136 = vmatprep.subr.mxu0 0.0
    %137 = vmatpush1.msra.mxu0 0.0
    %138 = vmatprep.subr.mxu0 0.0
    %139 = vmatpush1.msra.mxu0 0.0
    %140 = vmatprep.subr.mxu0 0.0
    %141 = vmatpush1.msra.mxu0 0.0
    %142 = vmatprep.subr.mxu0 0.0
    %143 = vmatpush1.msra.mxu0 0.0
    %144 = vmatprep.subr.mxu0 0.0
    %145 = vmatpush1.msra.mxu0 0.0
    %146 = vmatprep.subr.mxu0 0.0
    %147 = vmatpush1.msra.mxu0 0.0
    %148 = vmatprep.subr.mxu0 0.0
    %149 = vmatpush1.msra.mxu0 0.0
    %150 = vmatprep.subr.mxu0 0.0
    %151 = vmatpush1.msra.mxu0 0.0
    %152 = vmatprep.subr.mxu0 0.0
    %153 = vmatpush1.msra.mxu0 0.0
    %154 = vmatprep.subr.mxu0 0.0
    %155 = vmatpush1.msra.mxu0 0.0
    %156 = vmatprep.subr.mxu0 0.0
    %157 = vmatpush1.msra.mxu0 0.0
    %158 = vmatprep.subr.mxu0 0.0
    %159 = vmatpush1.msra.mxu0 0.0
    %160 = vmatprep.subr.mxu0 0.0
    %161 = vmatpush1.msra.mxu0 0.0
    %162 = vmatprep.subr.mxu0 0.0
    %163 = vmatpush1.msra.mxu0 0.0
    %164 = vmatprep.subr.mxu0 0.0
    %165 = vmatpush1.msra.mxu0 0.0
    %166 = vmatprep.subr.mxu0 0.0
    %167 = vmatpush1.msra.mxu0 0.0
    %168 = vmatprep.subr.mxu0 0.0
    %169 = vmatpush1.msra.mxu0 0.0
    %170 = vmatprep.subr.mxu0 0.0
    %171 = vmatpush1.msra.mxu0 0.0
    %172 = vmatprep.mubr.f32.mxu0 0.0
    %173 = vmatmul.mubr.f32.gmra.mrb[0].mxu0 %v25
    %v174 = vpop.f32.mrb[0].mxu0
    %v175 = vadd.f32 %v21, %v174
    %v176 = vpop.f32.mrb[0].mxu0
    %177 = vdwg.mxu0
    %s178 = scalar_lea.vmem [#allocation2], 8
    %179 = vst.msk [vmem:[%s178] sm:$0xff] %vm101, %v175
    // Predicated region
    $region14: #{tpu_custom_call.1} parent=1 // pred_check
      _
    $region15: #{tpu_custom_call.1} parent=1 // pred_check_branch
      %181 = sbr.rel (0) target = $region17
    $region16: #{tpu_custom_call.1} parent=1 // pred_region
      %s183 = ssub.s32 256, 256
      %184 = vsyncadd [#allocation3], %s183
      %s185 = sshll.u32 [#allocation2], 4
      %s186 = int_to_ptr.vmem [resolvable:$true] %s185
      %191 = dma.vmem_to_hbm [thread:$0]  %s186, 256, %s3, [#allocation3], 128, 128, 8
    $region17: #{tpu_custom_call.1} parent=1 // pred_fallthru
      _
    // Predicated region
    $region18: #{tpu_custom_call.1} parent=1 // pred_check
      _
    $region19: #{tpu_custom_call.1} parent=1 // pred_check_branch
      %193 = sbr.rel (0) target = $region21
    $region20: #{tpu_custom_call.1} parent=1 // pred_region
      %194 = dma.done [#allocation3], 256
    $region21: #{tpu_custom_call.1} parent=1 // pred_fallthru
      _
    %195 = vsyncpa [#allocation3], 1

</llo_original>
